<compile_context>
chip_gen: v7x
topology: tpu7x:2x2x1
jax: 0.10.0
libtpu: 0.0.40
codegen_flags: <defaults>
</compile_context>

<pallas_src>
import functools

import jax
import jax.numpy as jnp
from jax import lax
from jax.experimental import pallas as pl
from jax.experimental.pallas import tpu as pltpu

EPS = 1e-5
ETA = 0.9

_VMEM_LIMIT_BYTES = 48 * 1024 * 1024   # explicit scoped-VMEM budget (safe on v7x's 64 MiB)
_MAX_BLOCK_BYTES = 8 * 1024 * 1024     # per-block cap: ~4x (in+out double buffers) <= 32 MiB


def _gbn_kernel(x_ref, gamma_ref, bias_ref, y_ref, gbm_ref, gbs_ref):
    # x_ref block: (G_TILE, gbs, F, P) -- NCL layout, pixels on the lane axis.
    x = x_ref[...].astype(jnp.float32)
    _, gbs, _, p = x.shape
    n = gbs * p  # samples per (ghost batch, feature); stride == 1

    # ---- two-pass per-(ghost batch, feature) stats -------------------------------------
    # lane reduce first (XLU slot, idle in this mem-bound kernel), then the small
    # cross-row reduction on the already-collapsed tensor (cheap VPU adds).
    s_lane = jnp.sum(x, axis=3, keepdims=True)                        # (G, gbs, F, 1)
    mean = jnp.sum(s_lane, axis=1, keepdims=True) * (1.0 / n)         # (G, 1, F, 1)

    diff = x - mean
    d_lane = jnp.sum(diff * diff, axis=3, keepdims=True)              # (G, gbs, F, 1)
    var = jnp.sum(d_lane, axis=1, keepdims=True) * (1.0 / (n - 1))    # unbiased (torch.var)

    std = jnp.sqrt(var + EPS)          # (G,1,F,1) exact sqrt for the running-stat output
    inv_std = lax.rsqrt(var + EPS)     # EUP slot -> off the VALU critical path

    # ---- fold the affine: y = x * scale + shift (2 big-tensor VALU ops) ----------------
    gamma = gamma_ref[...]             # (1, 1, F, 1)
    bias = bias_ref[...]               # (1, 1, F, 1)
    scale = gamma * inv_std            # (G, 1, F, 1)
    shift = bias - mean * scale        # (G, 1, F, 1)

    y_ref[...] = (x * scale + shift).astype(y_ref.dtype)
    gbm_ref[...] = mean
    gbs_ref[...] = std


def _pick_g_tile(n_ghost_batches, per_ghost_bytes, max_block_bytes):
    """Largest divisor of NG whose block fits the budget, keeping >=2 grid steps if possible."""
    best = 1
    for g in range(1, n_ghost_batches + 1):
        if n_ghost_batches % g:
            continue
        if g * per_ghost_bytes > max_block_bytes:
            continue
        if n_ghost_batches >= 2 and (n_ghost_batches // g) < 2:
            continue  # keep both v7x TensorCores busy
        best = max(best, g)
    return best


def ghost_batch_norm_forward(x, gamma, bias, m, s, *, n_ghost_batches,
                             eta=ETA, initialized=False):
    """Training-mode forward of Ghost_Batch_Norm (non-conv, stride=1, running_stats=True).

    Args:
      x: (B, F, P) input, NCL layout like the PyTorch module (Conv1d-style).
      gamma, bias: (F,) affine parameters.
      m, s: (1, 1, 1, F) running mean/std buffers.
      n_ghost_batches: static python int > 0; must divide B.
      eta: running-stat momentum.
      initialized: static python bool; first-call vs eta-blended buffer update.

    Returns:
      y: (B, F, P) normalized output (same dtype as x).
      m_new, s_new: updated running-stat buffers, shape (1, 1, 1, F).
    """
    B, F, P = x.shape
    assert n_ghost_batches > 0 and B % n_ghost_batches == 0
    gbs_size = B // n_ghost_batches
    assert gbs_size * P > 1, "unbiased variance needs >= 2 samples per ghost batch"

    # NCL stays NCL: contiguous (free) reshape, no transpose passes through HBM.
    x_g = x.reshape(n_ghost_batches, gbs_size, F, P)
    gamma4 = gamma.reshape(1, 1, F, 1).astype(jnp.float32)
    bias4 = bias.reshape(1, 1, F, 1).astype(jnp.float32)

    per_ghost_bytes = gbs_size * F * P * x.dtype.itemsize
    g_tile = _pick_g_tile(n_ghost_batches, per_ghost_bytes, _MAX_BLOCK_BYTES)
    steps = n_ghost_batches // g_tile
    # TODO(synk): if a single ghost batch ever exceeds the VMEM budget, add a second
    # ("arbitrary") grid axis over gbs*P chunks with sum/sum-sq accumulators in scratch.

    y_g, gbm, gbsd = pl.pallas_call(
        _gbn_kernel,
        out_shape=(
            jax.ShapeDtypeStruct((n_ghost_batches, gbs_size, F, P), x.dtype),
            jax.ShapeDtypeStruct((n_ghost_batches, 1, F, 1), jnp.float32),
            jax.ShapeDtypeStruct((n_ghost_batches, 1, F, 1), jnp.float32),
        ),
        grid_spec=pltpu.PrefetchScalarGridSpec(
            num_scalar_prefetch=0,
            grid=(steps,),
            in_specs=[
                pl.BlockSpec((g_tile, gbs_size, F, P), lambda g: (g, 0, 0, 0)),
                pl.BlockSpec((1, 1, F, 1), lambda g: (0, 0, 0, 0)),
                pl.BlockSpec((1, 1, F, 1), lambda g: (0, 0, 0, 0)),
            ],
            out_specs=[
                pl.BlockSpec((g_tile, gbs_size, F, P), lambda g: (g, 0, 0, 0)),
                pl.BlockSpec((g_tile, 1, F, 1), lambda g: (g, 0, 0, 0)),
                pl.BlockSpec((g_tile, 1, F, 1), lambda g: (g, 0, 0, 0)),
            ],
        ),
        compiler_params=pltpu.CompilerParams(
            dimension_semantics=("parallel",),
            vmem_limit_bytes=_VMEM_LIMIT_BYTES,
        ),
    )(x_g, gamma4, bias4)

    y = y_g.reshape(B, F, P)  # free reshape back, still NCL

    # Running-stat update on the tiny per-feature tensors (plain JAX, negligible cost).
    bm = jnp.mean(gbm, axis=0).reshape(1, 1, 1, F)
    bs = jnp.mean(gbsd, axis=0).reshape(1, 1, 1, F)
    if initialized:
        m_new = eta * m + (1.0 - eta) * bm
        s_new = eta * s + (1.0 - eta) * bs
    else:
        m_new = bm
        s_new = bs
    return y, m_new, s_new


def _reference(x, gamma, bias, m, s, n_ghost_batches, initialized, eta=ETA):
    """Pure-JAX transcription of the PyTorch forward (training, n_ghost_batches > 0, stride=1)."""
    B, F, P = x.shape
    gbs_size = B // n_ghost_batches
    xt = jnp.transpose(x, (0, 2, 1)).reshape(n_ghost_batches, gbs_size * P, 1, F)
    gbm = jnp.mean(xt, axis=1, keepdims=True)
    gbsd = jnp.sqrt(jnp.var(xt, axis=1, keepdims=True, ddof=1) + EPS)
    bm = jnp.mean(gbm, axis=0, keepdims=True)
    bs = jnp.mean(gbsd, axis=0, keepdims=True)
    if initialized:
        m_new = eta * m + (1.0 - eta) * bm
        s_new = eta * s + (1.0 - eta) * bs
    else:
        m_new, s_new = bm, bs
    y = (xt - gbm) / gbsd * gamma + bias
    y = jnp.transpose(y.reshape(B, P, F), (0, 2, 1))
    return y, m_new, s_new


if __name__ == "__main__":
    # small but lane-dense shapes: batch=64, features=8, pixels=128; 8 ghost batches of 8.
    B, F, P = 64, 8, 128
    NG = 8

    key = jax.random.PRNGKey(0)
    k1, k2 = jax.random.split(key)
    x1 = jax.random.normal(k1, (B, F, P), dtype=jnp.float32) * 1.7 + 0.3
    x2 = jax.random.normal(k2, (B, F, P), dtype=jnp.float32) * 0.8 - 0.5

    # deterministic, non-trivial affine parameters (module init is ones/zeros)
    gamma = 1.0 + 0.1 * jnp.arange(F, dtype=jnp.float32)
    bias = 0.05 * jnp.arange(F, dtype=jnp.float32) - 0.2

    m0 = jnp.zeros((1, 1, 1, F), jnp.float32)
    s0 = jnp.ones((1, 1, 1, F), jnp.float32)

    fwd_first = jax.jit(functools.partial(
        ghost_batch_norm_forward, n_ghost_batches=NG, initialized=False))
    fwd_later = jax.jit(functools.partial(
        ghost_batch_norm_forward, n_ghost_batches=NG, initialized=True))

    # first training step (initialized=False -> m,s := batch stats)
    y1, m1, s1 = fwd_first(x1, gamma, bias, m0, s0)
    jax.block_until_ready(y1)
    y1_ref, m1_ref, s1_ref = _reference(x1, gamma, bias, m0, s0, NG, initialized=False)
    assert y1.shape == (B, F, P) and y1.dtype == x1.dtype
    assert jnp.allclose(y1, y1_ref, atol=1e-4, rtol=1e-4)
    assert jnp.allclose(m1.reshape(-1), m1_ref.reshape(-1), atol=1e-4, rtol=1e-4)
    assert jnp.allclose(s1.reshape(-1), s1_ref.reshape(-1), atol=1e-4, rtol=1e-4)

    # second training step (initialized=True -> eta-blended running stats)
    y2, m2, s2 = fwd_later(x2, gamma, bias, m1, s1)
    jax.block_until_ready(y2)
    y2_ref, m2_ref, s2_ref = _reference(x2, gamma, bias, m1_ref, s1_ref, NG, initialized=True)
    assert jnp.allclose(y2, y2_ref, atol=1e-4, rtol=1e-4)
    assert jnp.allclose(m2.reshape(-1), m2_ref.reshape(-1), atol=1e-4, rtol=1e-4)
    assert jnp.allclose(s2.reshape(-1), s2_ref.reshape(-1), atol=1e-4, rtol=1e-4)

    print("KERNEL_OK")
</pallas_src>

<mosaic_0001>
module attributes {stable_mosaic.version = 11 : i64} {
  func.func @_gbn_kernel(%arg0: i32, %arg1: memref<4x8x8x128xf32, #tpu.memory_space<vmem>>, %arg2: memref<1x1x8x1xf32, #tpu.memory_space<vmem>>, %arg3: memref<1x1x8x1xf32, #tpu.memory_space<vmem>>, %arg4: memref<4x8x8x128xf32, #tpu.memory_space<vmem>>, %arg5: memref<4x1x8x1xf32, #tpu.memory_space<vmem>>, %arg6: memref<4x1x8x1xf32, #tpu.memory_space<vmem>>) attributes {dimension_semantics = [#tpu.dimension_semantics<parallel>], iteration_bounds = array<i64: 2>, scalar_prefetch = 0 : i64, scratch_operands = 0 : i64, tpu.core_type = #tpu.core_type<tc>, window_params = [{transform_indices = @transform_0, window_bounds = array<i64: 4, 8, 8, 128>}, {pipeline_mode = #tpu.pipeline_mode<synchronous>, transform_indices = @transform_1, window_bounds = array<i64: 1, 1, 8, 1>}, {pipeline_mode = #tpu.pipeline_mode<synchronous>, transform_indices = @transform_2, window_bounds = array<i64: 1, 1, 8, 1>}, {transform_indices = @transform_3, window_bounds = array<i64: 4, 8, 8, 128>}, {transform_indices = @transform_4, window_bounds = array<i64: 4, 1, 8, 1>}, {transform_indices = @transform_5, window_bounds = array<i64: 4, 1, 8, 1>}]} {
    %c0 = arith.constant 0 : index
    %c0_0 = arith.constant 0 : index
    %c0_1 = arith.constant 0 : index
    %c0_2 = arith.constant 0 : index
    %0 = vector.load %arg1[%c0, %c0_0, %c0_1, %c0_2] : memref<4x8x8x128xf32, #tpu.memory_space<vmem>>, vector<4x8x8x128xf32>
    %cst = arith.constant dense<0.000000e+00> : vector<4x8x8xf32>
    %1 = vector.multi_reduction <add>, %0, %cst [3] : vector<4x8x8x128xf32> to vector<4x8x8xf32>
    %2 = vector.shape_cast %1 : vector<4x8x8xf32> to vector<4x8x8x1xf32>
    %cst_3 = arith.constant dense<0.000000e+00> : vector<4x8x1xf32>
    %3 = vector.multi_reduction <add>, %2, %cst_3 [1] : vector<4x8x8x1xf32> to vector<4x8x1xf32>
    %4 = vector.shape_cast %3 : vector<4x8x1xf32> to vector<4x1x8x1xf32>
    %cst_4 = arith.constant 9.765625E-4 : f32
    %5 = vector.broadcast %cst_4 : f32 to vector<4x1x8x1xf32>
    %6 = arith.mulf %4, %5 : vector<4x1x8x1xf32>
    %7 = vector.broadcast %6 : vector<4x1x8x1xf32> to vector<4x8x8x128xf32>
    %8 = arith.subf %0, %7 : vector<4x8x8x128xf32>
    %9 = arith.mulf %8, %8 : vector<4x8x8x128xf32>
    %cst_5 = arith.constant dense<0.000000e+00> : vector<4x8x8xf32>
    %10 = vector.multi_reduction <add>, %9, %cst_5 [3] : vector<4x8x8x128xf32> to vector<4x8x8xf32>
    %11 = vector.shape_cast %10 : vector<4x8x8xf32> to vector<4x8x8x1xf32>
    %cst_6 = arith.constant dense<0.000000e+00> : vector<4x8x1xf32>
    %12 = vector.multi_reduction <add>, %11, %cst_6 [1] : vector<4x8x8x1xf32> to vector<4x8x1xf32>
    %13 = vector.shape_cast %12 : vector<4x8x1xf32> to vector<4x1x8x1xf32>
    %cst_7 = arith.constant 9.77517105E-4 : f32
    %14 = vector.broadcast %cst_7 : f32 to vector<4x1x8x1xf32>
    %15 = arith.mulf %13, %14 : vector<4x1x8x1xf32>
    %cst_8 = arith.constant 9.99999974E-6 : f32
    %16 = vector.broadcast %cst_8 : f32 to vector<4x1x8x1xf32>
    %17 = arith.addf %15, %16 : vector<4x1x8x1xf32>
    %18 = math.sqrt %17 : vector<4x1x8x1xf32>
    %cst_9 = arith.constant 9.99999974E-6 : f32
    %19 = vector.broadcast %cst_9 : f32 to vector<4x1x8x1xf32>
    %20 = arith.addf %15, %19 : vector<4x1x8x1xf32>
    %21 = math.rsqrt %20 : vector<4x1x8x1xf32>
    %c0_10 = arith.constant 0 : index
    %c0_11 = arith.constant 0 : index
    %c0_12 = arith.constant 0 : index
    %c0_13 = arith.constant 0 : index
    %22 = vector.load %arg2[%c0_10, %c0_11, %c0_12, %c0_13] : memref<1x1x8x1xf32, #tpu.memory_space<vmem>>, vector<1x1x8x1xf32>
    %c0_14 = arith.constant 0 : index
    %c0_15 = arith.constant 0 : index
    %c0_16 = arith.constant 0 : index
    %c0_17 = arith.constant 0 : index
    %23 = vector.load %arg3[%c0_14, %c0_15, %c0_16, %c0_17] : memref<1x1x8x1xf32, #tpu.memory_space<vmem>>, vector<1x1x8x1xf32>
    %24 = vector.broadcast %22 : vector<1x1x8x1xf32> to vector<4x1x8x1xf32>
    %25 = arith.mulf %24, %21 : vector<4x1x8x1xf32>
    %26 = arith.mulf %6, %25 : vector<4x1x8x1xf32>
    %27 = vector.broadcast %23 : vector<1x1x8x1xf32> to vector<4x1x8x1xf32>
    %28 = arith.subf %27, %26 : vector<4x1x8x1xf32>
    %29 = vector.broadcast %25 : vector<4x1x8x1xf32> to vector<4x8x8x128xf32>
    %30 = arith.mulf %0, %29 : vector<4x8x8x128xf32>
    %31 = vector.broadcast %28 : vector<4x1x8x1xf32> to vector<4x8x8x128xf32>
    %32 = arith.addf %30, %31 : vector<4x8x8x128xf32>
    %c0_18 = arith.constant 0 : index
    %c0_19 = arith.constant 0 : index
    %c0_20 = arith.constant 0 : index
    %c0_21 = arith.constant 0 : index
    %33 = vector.load %arg4[%c0_18, %c0_19, %c0_20, %c0_21] : memref<4x8x8x128xf32, #tpu.memory_space<vmem>>, vector<4x8x8x128xf32>
    tpu.vector_store %arg4[%c0_18, %c0_19, %c0_20, %c0_21], %32 {strides = array<i32>} : memref<4x8x8x128xf32, #tpu.memory_space<vmem>>, vector<4x8x8x128xf32>,
    %c0_22 = arith.constant 0 : index
    %c0_23 = arith.constant 0 : index
    %c0_24 = arith.constant 0 : index
    %c0_25 = arith.constant 0 : index
    %34 = vector.load %arg5[%c0_22, %c0_23, %c0_24, %c0_25] : memref<4x1x8x1xf32, #tpu.memory_space<vmem>>, vector<4x1x8x1xf32>
    tpu.vector_store %arg5[%c0_22, %c0_23, %c0_24, %c0_25], %6 {strides = array<i32>} : memref<4x1x8x1xf32, #tpu.memory_space<vmem>>, vector<4x1x8x1xf32>,
    %c0_26 = arith.constant 0 : index
    %c0_27 = arith.constant 0 : index
    %c0_28 = arith.constant 0 : index
    %c0_29 = arith.constant 0 : index
    %35 = vector.load %arg6[%c0_26, %c0_27, %c0_28, %c0_29] : memref<4x1x8x1xf32, #tpu.memory_space<vmem>>, vector<4x1x8x1xf32>
    tpu.vector_store %arg6[%c0_26, %c0_27, %c0_28, %c0_29], %18 {strides = array<i32>} : memref<4x1x8x1xf32, #tpu.memory_space<vmem>>, vector<4x1x8x1xf32>,
    return
  }
  func.func @transform_0(%arg0: i32) -> (i32, i32, i32, i32) {
    %c0_i32 = arith.constant 0 : i32
    %c0_i32_0 = arith.constant 0 : i32
    %c0_i32_1 = arith.constant 0 : i32
    %c0_i32_2 = arith.constant 0 : i32
    return %arg0, %c0_i32, %c0_i32_0, %c0_i32_1 : i32, i32, i32, i32
  }
  func.func @transform_1(%arg0: i32) -> (i32, i32, i32, i32) {
    %c0_i32 = arith.constant 0 : i32
    %c0_i32_0 = arith.constant 0 : i32
    %c0_i32_1 = arith.constant 0 : i32
    %c0_i32_2 = arith.constant 0 : i32
    %c0_i32_3 = arith.constant 0 : i32
    return %c0_i32, %c0_i32_0, %c0_i32_1, %c0_i32_2 : i32, i32, i32, i32
  }
  func.func @transform_2(%arg0: i32) -> (i32, i32, i32, i32) {
    %c0_i32 = arith.constant 0 : i32
    %c0_i32_0 = arith.constant 0 : i32
    %c0_i32_1 = arith.constant 0 : i32
    %c0_i32_2 = arith.constant 0 : i32
    %c0_i32_3 = arith.constant 0 : i32
    return %c0_i32, %c0_i32_0, %c0_i32_1, %c0_i32_2 : i32, i32, i32, i32
  }
  func.func @transform_3(%arg0: i32) -> (i32, i32, i32, i32) {
    %c0_i32 = arith.constant 0 : i32
    %c0_i32_0 = arith.constant 0 : i32
    %c0_i32_1 = arith.constant 0 : i32
    %c0_i32_2 = arith.constant 0 : i32
    return %arg0, %c0_i32, %c0_i32_0, %c0_i32_1 : i32, i32, i32, i32
  }
  func.func @transform_4(%arg0: i32) -> (i32, i32, i32, i32) {
    %c0_i32 = arith.constant 0 : i32
    %c0_i32_0 = arith.constant 0 : i32
    %c0_i32_1 = arith.constant 0 : i32
    %c0_i32_2 = arith.constant 0 : i32
    return %arg0, %c0_i32, %c0_i32_0, %c0_i32_1 : i32, i32, i32, i32
  }
  func.func @transform_5(%arg0: i32) -> (i32, i32, i32, i32) {
    %c0_i32 = arith.constant 0 : i32
    %c0_i32_0 = arith.constant 0 : i32
    %c0_i32_1 = arith.constant 0 : i32
    %c0_i32_2 = arith.constant 0 : i32
    return %arg0, %c0_i32, %c0_i32_0, %c0_i32_1 : i32, i32, i32, i32
  }
}

</mosaic_0001>

<llo_original>
// kernel: ghost_batch_norm_forward.1
$region0: #{ghost_batch_norm_forward.1}
  #allocation0 [shape = 'u32[]', space=smem, size = 0x4, offset = 0x4, fixed_abs, tag = 'smem constant byte address 0x4 - core index']
  #allocation1 [shape = 'u32[144,128]{1,0:T(1,128)}', space=vmem, size = 0x12000, scoped, tag = 'internal scratch']
  %s0 = inlined_call_operand.hbm [shape: f32[8,8,8,128], index: 0, kind: input, shape index: {}]
  %s1 = inlined_call_operand.vmem [shape: f32[1,1,8,1], index: 1, kind: input, shape index: {}]
  %s2 = inlined_call_operand.vmem [shape: f32[1,1,8,1], index: 2, kind: input, shape index: {}]
  %s3 = inlined_call_operand.hbm [shape: f32[8,8,8,128], index: 3, kind: output, shape index: {0}]
  %s4 = inlined_call_operand.vmem [shape: f32[8,1,8,1], index: 4, kind: output, shape index: {1}]
  %s5 = inlined_call_operand.vmem [shape: f32[8,1,8,1], index: 5, kind: output, shape index: {2}]
  %6 = xla_tuple %s3, %s4, %s5
  %s7 = sld [smem:[#allocation0]]
  $region65: #{ghost_batch_norm_forward.1} parent=0
    _
  %s9 = ssub.s32 1, %s7
  %s10 = scalar_select 0, %s9, %s7
  $region1: #{ghost_batch_norm_forward.1} parent=0
    #allocation2 [shape = 'u8[262144]{0}', space=vmem, size = 0x40000, scoped, tag = 'input window, operand 0']
    #allocation3 [shape = 's32[2]{0}', space=sflag, size = 0x8, scoped, tag = 'scoped memory for ghost_batch_norm_forward.1']
    #allocation4 [shape = 's32[2]{0}', space=sflag, size = 0x8, scoped, tag = 'scoped memory for ghost_batch_norm_forward.1']
    #allocation5 [shape = 'u8[262144]{0}', space=vmem, size = 0x40000, scoped, tag = 'output window, operand 0']
    %11 = vsyncpa [#allocation3], 0
    %s12 = scalar_lea.sflag [#allocation3], 1
    %13 = vsyncpa %s12, 0
    %14 = vsyncpa [#allocation4], 0
    %s15 = scalar_lea.sflag [#allocation4], 1
    %16 = vsyncpa %s15, 0
    loop: start=0, step=1, limit=4
    $region2: #{ghost_batch_norm_forward.1} parent=1 // loop_pre_header
      _
    $region3: #{ghost_batch_norm_forward.1} parent=1 // loop_header
      %s18 = sphi 0, %s22
      %p19 = scmp.ge.s32.totalorder %s18, 4
      %s28 = sphi 0, %s30
      %s31 = sphi 0, %s28
      %s32 = sphi 0, %s31
      %s48 = sphi 0, %s32
      %s52 = sphi 0, %s52
      %s54 = sphi 0, %s52
      %s55 = sphi 0, %s54
      %s69 = sphi 0, %s55
      %s73 = sphi 0, %s73
      %s75 = sphi 0, %s73
      %s76 = sphi 0, %s75
      %s90 = sphi 0, %s76
      %s96 = sphi 0, %s98
      %s99 = sphi 0, %s96
      %s100 = sphi 0, %s99
      %s116 = sphi 0, %s100
      %s122 = sphi 0, %s124
      %s125 = sphi 0, %s122
      %s126 = sphi 0, %s125
      %s142 = sphi 0, %s126
      %s148 = sphi 0, %s150
      %s151 = sphi 0, %s148
      %s152 = sphi 0, %s151
      %s168 = sphi 0, %s152
    $region4: #{ghost_batch_norm_forward.1} parent=1 // loop_header_branch
      %21 = sbr.rel (%p19) target = $region8
    $region5: #{ghost_batch_norm_forward.1} parent=1 // loop_body
      %s23 = ssub.s32 %s18, 1
      %s24 = ssub.s32 %s18, 2
      %s25 = sadd.s32 %s18, 1
      %s26 = ssub.s32 %s18, %s25
      %p27 = scmp.eq.s32.totalorder %s26, 0
      %s29 = sadd.s32 %s28, 1
      %s30 = scalar_select %p27, %s28, %s29
      %p33 = pneg %p27
      %p34 = scmp.eq.s32.totalorder %s18, 1
      %p35 = por %p33, %p34
      %p36 = scmp.ne.s32.totalorder %s28, %s31
      %p37 = scmp.eq.s32.totalorder %s18, 0
      %p38 = por %p36, %p37
      %p39 = scmp.ne.s32.totalorder %s28, %s31
      %p40 = scmp.eq.s32.totalorder %s23, 1
      %p41 = por %p39, %p40
      %p42 = scmp.ne.s32.totalorder %s31, %s32
      %p43 = scmp.eq.s32.totalorder %s23, 0
      %p44 = por %p42, %p43
      %p45 = scmp.ne.s32.totalorder %s31, %s32
      %p46 = scmp.eq.s32.totalorder %s24, 1
      %p47 = por %p45, %p46
      %p49 = scmp.ne.s32.totalorder %s32, %s48
      %p50 = scmp.eq.s32.totalorder %s24, 0
      %p51 = por %p49, %p50
      %s53 = sadd.s32 %s52, 1
      %p56 = scmp.eq.s32.totalorder %s18, 1
      %p57 = scmp.ne.s32.totalorder %s52, %s54
      %p58 = scmp.eq.s32.totalorder %s18, 0
      %p59 = por %p57, %p58
      %p60 = scmp.ne.s32.totalorder %s52, %s54
      %p61 = scmp.eq.s32.totalorder %s23, 1
      %p62 = por %p60, %p61
      %p63 = scmp.ne.s32.totalorder %s54, %s55
      %p64 = scmp.eq.s32.totalorder %s23, 0
      %p65 = por %p63, %p64
      %p66 = scmp.ne.s32.totalorder %s54, %s55
      %p67 = scmp.eq.s32.totalorder %s24, 1
      %p68 = por %p66, %p67
      %p70 = scmp.ne.s32.totalorder %s55, %s69
      %p71 = scmp.eq.s32.totalorder %s24, 0
      %p72 = por %p70, %p71
      %s74 = sadd.s32 %s73, 1
      %p77 = scmp.eq.s32.totalorder %s18, 1
      %p78 = scmp.ne.s32.totalorder %s73, %s75
      %p79 = scmp.eq.s32.totalorder %s18, 0
      %p80 = por %p78, %p79
      %p81 = scmp.ne.s32.totalorder %s73, %s75
      %p82 = scmp.eq.s32.totalorder %s23, 1
      %p83 = por %p81, %p82
      %p84 = scmp.ne.s32.totalorder %s75, %s76
      %p85 = scmp.eq.s32.totalorder %s23, 0
      %p86 = por %p84, %p85
      %p87 = scmp.ne.s32.totalorder %s75, %s76
      %p88 = scmp.eq.s32.totalorder %s24, 1
      %p89 = por %p87, %p88
      %p91 = scmp.ne.s32.totalorder %s76, %s90
      %p92 = scmp.eq.s32.totalorder %s24, 0
      %p93 = por %p91, %p92
      %s94 = ssub.s32 %s18, %s25
      %p95 = scmp.eq.s32.totalorder %s94, 0
      %s97 = sadd.s32 %s96, 1
      %s98 = scalar_select %p95, %s96, %s97
      %p101 = pneg %p95
      %p102 = scmp.eq.s32.totalorder %s18, 1
      %p103 = por %p101, %p102
      %p104 = scmp.ne.s32.totalorder %s96, %s99
      %p105 = scmp.eq.s32.totalorder %s18, 0
      %p106 = por %p104, %p105
      %p107 = scmp.ne.s32.totalorder %s96, %s99
      %p108 = scmp.eq.s32.totalorder %s23, 1
      %p109 = por %p107, %p108
      %p110 = scmp.ne.s32.totalorder %s99, %s100
      %p111 = scmp.eq.s32.totalorder %s23, 0
      %p112 = por %p110, %p111
      %p113 = scmp.ne.s32.totalorder %s99, %s100
      %p114 = scmp.eq.s32.totalorder %s24, 1
      %p115 = por %p113, %p114
      %p117 = scmp.ne.s32.totalorder %s100, %s116
      %p118 = scmp.eq.s32.totalorder %s24, 0
      %p119 = por %p117, %p118
      %s120 = ssub.s32 %s18, %s25
      %p121 = scmp.eq.s32.totalorder %s120, 0
      %s123 = sadd.s32 %s122, 1
      %s124 = scalar_select %p121, %s122, %s123
      %p127 = pneg %p121
      %p128 = scmp.eq.s32.totalorder %s18, 1
      %p129 = por %p127, %p128
      %p130 = scmp.ne.s32.totalorder %s122, %s125
      %p131 = scmp.eq.s32.totalorder %s18, 0
      %p132 = por %p130, %p131
      %p133 = scmp.ne.s32.totalorder %s122, %s125
      %p134 = scmp.eq.s32.totalorder %s23, 1
      %p135 = por %p133, %p134
      %p136 = scmp.ne.s32.totalorder %s125, %s126
      %p137 = scmp.eq.s32.totalorder %s23, 0
      %p138 = por %p136, %p137
      %p139 = scmp.ne.s32.totalorder %s125, %s126
      %p140 = scmp.eq.s32.totalorder %s24, 1
      %p141 = por %p139, %p140
      %p143 = scmp.ne.s32.totalorder %s126, %s142
      %p144 = scmp.eq.s32.totalorder %s24, 0
      %p145 = por %p143, %p144
      %s146 = ssub.s32 %s18, %s25
      %p147 = scmp.eq.s32.totalorder %s146, 0
      %s149 = sadd.s32 %s148, 1
      %s150 = scalar_select %p147, %s148, %s149
      %p153 = pneg %p147
      %p154 = scmp.eq.s32.totalorder %s18, 1
      %p155 = por %p153, %p154
      %p156 = scmp.ne.s32.totalorder %s148, %s151
      %p157 = scmp.eq.s32.totalorder %s18, 0
      %p158 = por %p156, %p157
      %p159 = scmp.ne.s32.totalorder %s148, %s151
      %p160 = scmp.eq.s32.totalorder %s23, 1
      %p161 = por %p159, %p160
      %p162 = scmp.ne.s32.totalorder %s151, %s152
      %p163 = scmp.eq.s32.totalorder %s23, 0
      %p164 = por %p162, %p163
      %p165 = scmp.ne.s32.totalorder %s151, %s152
      %p166 = scmp.eq.s32.totalorder %s24, 1
      %p167 = por %p165, %p166
      %p169 = scmp.ne.s32.totalorder %s152, %s168
      %p170 = scmp.eq.s32.totalorder %s24, 0
      %p171 = por %p169, %p170
      %p172 = scmp.le.s32.totalorder 1, %s18
      %p173 = scmp.lt.s32.totalorder %s18, 3
      %p174 = pnand %p172, %p173
      %p175 = pneg %p174
      // Predicated region
      $region9: #{ghost_batch_norm_forward.1} parent=5 // pred_check
        _
      $region10: #{ghost_batch_norm_forward.1} parent=5 // pred_check_branch
        %177 = sbr.rel (%p174) target = $region12
      $region11: #{ghost_batch_norm_forward.1} parent=5 // pred_region
        %s178 = ssub.s32 %s18, 1
        // Predicated region
        $region13: #{ghost_batch_norm_forward.1} parent=11 // pred_check
          %p179 = pneg %p65
        $region14: #{ghost_batch_norm_forward.1} parent=11 // pred_check_branch
          %181 = sbr.rel (%p179) target = $region16
        $region15: #{ghost_batch_norm_forward.1} parent=11 // pred_region
          _
        $region16: #{ghost_batch_norm_forward.1} parent=11 // pred_fallthru
          _
        // Predicated region
        $region17: #{ghost_batch_norm_forward.1} parent=11 // pred_check
          %p182 = pneg %p86
        $region18: #{ghost_batch_norm_forward.1} parent=11 // pred_check_branch
          %184 = sbr.rel (%p182) target = $region20
        $region19: #{ghost_batch_norm_forward.1} parent=11 // pred_region
          _
        $region20: #{ghost_batch_norm_forward.1} parent=11 // pred_fallthru
          _
      $region12: #{ghost_batch_norm_forward.1} parent=5 // pred_fallthru
        _
      %p185 = scmp.lt.s32.totalorder %s18, 2
      // Predicated region
      $region21: #{ghost_batch_norm_forward.1} parent=5 // pred_check
        %p186 = pneg %p185
      $region22: #{ghost_batch_norm_forward.1} parent=5 // pred_check_branch
        %188 = sbr.rel (%p186) target = $region24
      $region23: #{ghost_batch_norm_forward.1} parent=5 // pred_region
        // Predicated region
        $region25: #{ghost_batch_norm_forward.1} parent=23 // pred_check
          %p189 = pneg %p38
        $region26: #{ghost_batch_norm_forward.1} parent=23 // pred_check_branch
          %191 = sbr.rel (%p189) target = $region28
        $region27: #{ghost_batch_norm_forward.1} parent=23 // pred_region
          %s192 = sand.u32 %s28, 1
          %s193 = scalar_lea.sflag [#allocation3], %s192
          %s194 = sand.u32 %s28, 1
          %s195 = smul.addr %s194, 256
          %s196 = scalar_lea.vmem [#allocation2], %s195
          %s197 = smul.u32 4, %s18
          %s199 = ssub.s32 4096, 4096
          %200 = vsyncadd %s193, %s199
          %s201 = smul.addr %s197, 8
          %s202 = smul.addr %s201, 128
          %s203 = scalar_lea.hbm %s0, %s202
          %s204 = sshll.u32 %s196, 4
          %s205 = int_to_ptr.vmem [resolvable:$true] %s204
          %210 = dma.hbm_to_vmem [thread:$0]  %s203, 4096, %s205, %s193, 128, 128, 8
        $region28: #{ghost_batch_norm_forward.1} parent=23 // pred_fallthru
          _
      $region24: #{ghost_batch_norm_forward.1} parent=5 // pred_fallthru
        _
      %p211 = scmp.le.s32.totalorder 1, %s18
      %p212 = scmp.lt.s32.totalorder %s18, 3
      %p213 = pnand %p211, %p212
      %p214 = pneg %p213
      // Predicated region
      $region29: #{ghost_batch_norm_forward.1} parent=5 // pred_check
        _
      $region30: #{ghost_batch_norm_forward.1} parent=5 // pred_check_branch
        %216 = sbr.rel (%p213) target = $region32
      $region31: #{ghost_batch_norm_forward.1} parent=5 // pred_region
        %s217 = ssub.s32 %s18, 1
        %s218 = sand.u32 %s31, 1
        %s219 = scalar_lea.sflag [#allocation3], %s218
        %s220 = sand.u32 %s31, 1
        %s221 = smul.addr %s220, 256
        %s222 = scalar_lea.vmem [#allocation2], %s221
        // Predicated region
        $region33: #{ghost_batch_norm_forward.1} parent=31 // pred_check
          %p223 = pneg %p44
        $region34: #{ghost_batch_norm_forward.1} parent=31 // pred_check_branch
          %225 = sbr.rel (%p223) target = $region36
        $region35: #{ghost_batch_norm_forward.1} parent=31 // pred_region
          %226 = dma.done %s219, 4096
        $region36: #{ghost_batch_norm_forward.1} parent=31 // pred_fallthru
          _
        %s227 = sand.u32 %s31, 1
        %s228 = scalar_lea.sflag [#allocation3], %s227
        %s229 = sand.u32 %s31, 1
        %s230 = smul.addr %s229, 256
        %s231 = scalar_lea.vmem [#allocation2], %s230
        %p232 = pneg %p44
        %p233 = pneg %p41
        %p234 = pneg %p65
        %p235 = pneg %p62
        %p236 = pneg %p86
        %p237 = pneg %p83
        %p238 = pneg %p112
        %p239 = pneg %p109
        %s240 = sand.u32 %s99, 1
        %s241 = scalar_lea.sflag [#allocation4], %s240
        %s242 = sand.u32 %s99, 1
        %s243 = smul.addr %s242, 256
        %s244 = scalar_lea.vmem [#allocation5], %s243
        %p245 = pneg %p138
        %p246 = pneg %p135
        %s247 = smul.u32 4, %s23
        %p248 = scmp.lt.s32.totalorder %s247, 7
        %s249 = scalar_select %p248, %s247, 7
        %s250 = smul.addr %s249, 8
        %s251 = scalar_lea.vmem %s4, %s250
        %p252 = pneg %p164
        %p253 = pneg %p161
        %s254 = smul.u32 4, %s23
        %p255 = scmp.lt.s32.totalorder %s254, 7
        %s256 = scalar_select %p255, %s254, 7
        %s257 = smul.addr %s256, 8
        %s258 = scalar_lea.vmem %s5, %s257
        %s259 = smul.u32 4, %s23
        %s260 = smul.u32 4, %s23
        %s261 = smul.u32 4, %s23
        %p262 = scmp.lt.s32.totalorder %s261, 7
        %s263 = scalar_select %p262, %s261, 7
        %s264 = smul.addr %s263, 8
        %s265 = scalar_lea.vmem %s4, %s264
        %s266 = smul.u32 4, %s23
        %s267 = smul.u32 4, %s23
        %p268 = scmp.lt.s32.totalorder %s267, 7
        %s269 = scalar_select %p268, %s267, 7
        %s270 = smul.addr %s269, 8
        %s271 = scalar_lea.vmem %s5, %s270
        %s272 = smul.u32 4, %s23
        %v273 = vld [vmem:[%s222] sm:$0xff]
        %v274 = vld [vmem:[%s222 + $0x8] sm:$0xff]
        %v275 = vld [vmem:[%s222 + $0x10] sm:$0xff]
        %v276 = vld [vmem:[%s222 + $0x18] sm:$0xff]
        %v277 = vld [vmem:[%s222 + $0x20] sm:$0xff]
        %v278 = vld [vmem:[%s222 + $0x28] sm:$0xff]
        %v279 = vld [vmem:[%s222 + $0x30] sm:$0xff]
        %v280 = vld [vmem:[%s222 + $0x38] sm:$0xff]
        %v281 = vld [vmem:[%s222 + $0x40] sm:$0xff]
        %v282 = vld [vmem:[%s222 + $0x48] sm:$0xff]
        %v283 = vld [vmem:[%s222 + $0x50] sm:$0xff]
        %v284 = vld [vmem:[%s222 + $0x58] sm:$0xff]
        %v285 = vld [vmem:[%s222 + $0x60] sm:$0xff]
        %v286 = vld [vmem:[%s222 + $0x68] sm:$0xff]
        %v287 = vld [vmem:[%s222 + $0x70] sm:$0xff]
        %v288 = vld [vmem:[%s222 + $0x78] sm:$0xff]
        %v289 = vld [vmem:[%s222 + $0x80] sm:$0xff]
        %v290 = vld [vmem:[%s222 + $0x88] sm:$0xff]
        %v291 = vld [vmem:[%s222 + $0x90] sm:$0xff]
        %v292 = vld [vmem:[%s222 + $0x98] sm:$0xff]
        %v293 = vld [vmem:[%s222 + $0xa0] sm:$0xff]
        %v294 = vld [vmem:[%s222 + $0xa8] sm:$0xff]
        %v295 = vld [vmem:[%s222 + $0xb0] sm:$0xff]
        %v296 = vld [vmem:[%s222 + $0xb8] sm:$0xff]
        %v297 = vld [vmem:[%s222 + $0xc0] sm:$0xff]
        %v298 = vld [vmem:[%s222 + $0xc8] sm:$0xff]
        %v299 = vld [vmem:[%s222 + $0xd0] sm:$0xff]
        %v300 = vld [vmem:[%s222 + $0xd8] sm:$0xff]
        %v301 = vld [vmem:[%s222 + $0xe0] sm:$0xff]
        %v302 = vld [vmem:[%s222 + $0xe8] sm:$0xff]
        %v303 = vld [vmem:[%s222 + $0xf0] sm:$0xff]
        %v304 = vld [vmem:[%s222 + $0xf8] sm:$0xff]
        %305 = vadd.xlane.f32.xlu0 %v273
        %v306 = vpop.xlane.xlu0 %305
        %307 = vadd.xlane.f32.xlu0 %v274
        %v308 = vpop.xlane.xlu0 %307
        %309 = vadd.xlane.f32.xlu0 %v275
        %v310 = vpop.xlane.xlu0 %309
        %311 = vadd.xlane.f32.xlu0 %v276
        %v312 = vpop.xlane.xlu0 %311
        %313 = vadd.xlane.f32.xlu0 %v277
        %v314 = vpop.xlane.xlu0 %313
        %315 = vadd.xlane.f32.xlu0 %v278
        %v316 = vpop.xlane.xlu0 %315
        %317 = vadd.xlane.f32.xlu0 %v279
        %v318 = vpop.xlane.xlu0 %317
        %319 = vadd.xlane.f32.xlu0 %v280
        %v320 = vpop.xlane.xlu0 %319
        %321 = vadd.xlane.f32.xlu0 %v281
        %v322 = vpop.xlane.xlu0 %321
        %323 = vadd.xlane.f32.xlu0 %v282
        %v324 = vpop.xlane.xlu0 %323
        %325 = vadd.xlane.f32.xlu0 %v283
        %v326 = vpop.xlane.xlu0 %325
        %327 = vadd.xlane.f32.xlu0 %v284
        %v328 = vpop.xlane.xlu0 %327
        %329 = vadd.xlane.f32.xlu0 %v285
        %v330 = vpop.xlane.xlu0 %329
        %331 = vadd.xlane.f32.xlu0 %v286
        %v332 = vpop.xlane.xlu0 %331
        %333 = vadd.xlane.f32.xlu0 %v287
        %v334 = vpop.xlane.xlu0 %333
        %335 = vadd.xlane.f32.xlu0 %v288
        %v336 = vpop.xlane.xlu0 %335
        %337 = vadd.xlane.f32.xlu0 %v289
        %v338 = vpop.xlane.xlu0 %337
        %339 = vadd.xlane.f32.xlu0 %v290
        %v340 = vpop.xlane.xlu0 %339
        %341 = vadd.xlane.f32.xlu0 %v291
        %v342 = vpop.xlane.xlu0 %341
        %343 = vadd.xlane.f32.xlu0 %v292
        %v344 = vpop.xlane.xlu0 %343
        %345 = vadd.xlane.f32.xlu0 %v293
        %v346 = vpop.xlane.xlu0 %345
        %347 = vadd.xlane.f32.xlu0 %v294
        %v348 = vpop.xlane.xlu0 %347
        %349 = vadd.xlane.f32.xlu0 %v295
        %v350 = vpop.xlane.xlu0 %349
        %351 = vadd.xlane.f32.xlu0 %v296
        %v352 = vpop.xlane.xlu0 %351
        %353 = vadd.xlane.f32.xlu0 %v297
        %v354 = vpop.xlane.xlu0 %353
        %355 = vadd.xlane.f32.xlu0 %v298
        %v356 = vpop.xlane.xlu0 %355
        %357 = vadd.xlane.f32.xlu0 %v299
        %v358 = vpop.xlane.xlu0 %357
        %359 = vadd.xlane.f32.xlu0 %v300
        %v360 = vpop.xlane.xlu0 %359
        %361 = vadd.xlane.f32.xlu0 %v301
        %v362 = vpop.xlane.xlu0 %361
        %363 = vadd.xlane.f32.xlu0 %v302
        %v364 = vpop.xlane.xlu0 %363
        %365 = vadd.xlane.f32.xlu0 %v303
        %v366 = vpop.xlane.xlu0 %365
        %367 = vadd.xlane.f32.xlu0 %v304
        %v368 = vpop.xlane.xlu0 %367
        %v369 = vadd.f32 %v306, %v308
        %v370 = vadd.f32 %v369, %v310
        %v371 = vadd.f32 %v370, %v312
        %v372 = vadd.f32 %v371, %v314
        %v373 = vadd.f32 %v372, %v316
        %v374 = vadd.f32 %v373, %v318
        %v375 = vadd.f32 %v374, %v320
        %v376 = vadd.f32 %v322, %v324
        %v377 = vadd.f32 %v376, %v326
        %v378 = vadd.f32 %v377, %v328
        %v379 = vadd.f32 %v378, %v330
        %v380 = vadd.f32 %v379, %v332
        %v381 = vadd.f32 %v380, %v334
        %v382 = vadd.f32 %v381, %v336
        %v383 = vadd.f32 %v338, %v340
        %v384 = vadd.f32 %v383, %v342
        %v385 = vadd.f32 %v384, %v344
        %v386 = vadd.f32 %v385, %v346
        %v387 = vadd.f32 %v386, %v348
        %v388 = vadd.f32 %v387, %v350
        %v389 = vadd.f32 %v388, %v352
        %v390 = vadd.f32 %v354, %v356
        %v391 = vadd.f32 %v390, %v358
        %v392 = vadd.f32 %v391, %v360
        %v393 = vadd.f32 %v392, %v362
        %v394 = vadd.f32 %v393, %v364
        %v395 = vadd.f32 %v394, %v366
        %v396 = vadd.f32 %v395, %v368
        %v397 = vmul.f32 %v375, 0.0009765625
        %v398 = vmul.f32 %v382, 0.0009765625
        %v399 = vmul.f32 %v389, 0.0009765625
        %v400 = vmul.f32 %v396, 0.0009765625
        %v401 = vsub.f32 %v273, %v397
        %v402 = vsub.f32 %v274, %v397
        %v403 = vsub.f32 %v275, %v397
        %v404 = vsub.f32 %v276, %v397
        %v405 = vsub.f32 %v277, %v397
        %v406 = vsub.f32 %v278, %v397
        %v407 = vsub.f32 %v279, %v397
        %v408 = vsub.f32 %v280, %v397
        %v409 = vsub.f32 %v281, %v398
        %v410 = vsub.f32 %v282, %v398
        %v411 = vsub.f32 %v283, %v398
        %v412 = vsub.f32 %v284, %v398
        %v413 = vsub.f32 %v285, %v398
        %v414 = vsub.f32 %v286, %v398
        %v415 = vsub.f32 %v287, %v398
        %v416 = vsub.f32 %v288, %v398
        %v417 = vsub.f32 %v289, %v399
        %v418 = vsub.f32 %v290, %v399
        %v419 = vsub.f32 %v291, %v399
        %v420 = vsub.f32 %v292, %v399
        %v421 = vsub.f32 %v293, %v399
        %v422 = vsub.f32 %v294, %v399
        %v423 = vsub.f32 %v295, %v399
        %v424 = vsub.f32 %v296, %v399
        %v425 = vsub.f32 %v297, %v400
        %v426 = vsub.f32 %v298, %v400
        %v427 = vsub.f32 %v299, %v400
        %v428 = vsub.f32 %v300, %v400
        %v429 = vsub.f32 %v301, %v400
        %v430 = vsub.f32 %v302, %v400
        %v431 = vsub.f32 %v303, %v400
        %v432 = vsub.f32 %v304, %v400
        %v433 = vmul.f32 %v401, %v401
        %v434 = vmul.f32 %v402, %v402
        %v435 = vmul.f32 %v403, %v403
        %v436 = vmul.f32 %v404, %v404
        %v437 = vmul.f32 %v405, %v405
        %v438 = vmul.f32 %v406, %v406
        %v439 = vmul.f32 %v407, %v407
        %v440 = vmul.f32 %v408, %v408
        %v441 = vmul.f32 %v409, %v409
        %v442 = vmul.f32 %v410, %v410
        %v443 = vmul.f32 %v411, %v411
        %v444 = vmul.f32 %v412, %v412
        %v445 = vmul.f32 %v413, %v413
        %v446 = vmul.f32 %v414, %v414
        %v447 = vmul.f32 %v415, %v415
        %v448 = vmul.f32 %v416, %v416
        %v449 = vmul.f32 %v417, %v417
        %v450 = vmul.f32 %v418, %v418
        %v451 = vmul.f32 %v419, %v419
        %v452 = vmul.f32 %v420, %v420
        %v453 = vmul.f32 %v421, %v421
        %v454 = vmul.f32 %v422, %v422
        %v455 = vmul.f32 %v423, %v423
        %v456 = vmul.f32 %v424, %v424
        %v457 = vmul.f32 %v425, %v425
        %v458 = vmul.f32 %v426, %v426
        %v459 = vmul.f32 %v427, %v427
        %v460 = vmul.f32 %v428, %v428
        %v461 = vmul.f32 %v429, %v429
        %v462 = vmul.f32 %v430, %v430
        %v463 = vmul.f32 %v431, %v431
        %v464 = vmul.f32 %v432, %v432
        %465 = vadd.xlane.f32.xlu0 %v433
        %v466 = vpop.xlane.xlu0 %465
        %467 = vadd.xlane.f32.xlu0 %v434
        %v468 = vpop.xlane.xlu0 %467
        %469 = vadd.xlane.f32.xlu0 %v435
        %v470 = vpop.xlane.xlu0 %469
        %471 = vadd.xlane.f32.xlu0 %v436
        %v472 = vpop.xlane.xlu0 %471
        %473 = vadd.xlane.f32.xlu0 %v437
        %v474 = vpop.xlane.xlu0 %473
        %475 = vadd.xlane.f32.xlu0 %v438
        %v476 = vpop.xlane.xlu0 %475
        %477 = vadd.xlane.f32.xlu0 %v439
        %v478 = vpop.xlane.xlu0 %477
        %479 = vadd.xlane.f32.xlu0 %v440
        %v480 = vpop.xlane.xlu0 %479
        %481 = vadd.xlane.f32.xlu0 %v441
        %v482 = vpop.xlane.xlu0 %481
        %483 = vadd.xlane.f32.xlu0 %v442
        %v484 = vpop.xlane.xlu0 %483
        %485 = vadd.xlane.f32.xlu0 %v443
        %v486 = vpop.xlane.xlu0 %485
        %487 = vadd.xlane.f32.xlu0 %v444
        %v488 = vpop.xlane.xlu0 %487
        %489 = vadd.xlane.f32.xlu0 %v445
        %v490 = vpop.xlane.xlu0 %489
        %491 = vadd.xlane.f32.xlu0 %v446
        %v492 = vpop.xlane.xlu0 %491
        %493 = vadd.xlane.f32.xlu0 %v447
        %v494 = vpop.xlane.xlu0 %493
        %495 = vadd.xlane.f32.xlu0 %v448
        %v496 = vpop.xlane.xlu0 %495
        %497 = vadd.xlane.f32.xlu0 %v449
        %v498 = vpop.xlane.xlu0 %497
        %499 = vadd.xlane.f32.xlu0 %v450
        %v500 = vpop.xlane.xlu0 %499
        %501 = vadd.xlane.f32.xlu0 %v451
        %v502 = vpop.xlane.xlu0 %501
        %503 = vadd.xlane.f32.xlu0 %v452
        %v504 = vpop.xlane.xlu0 %503
        %505 = vadd.xlane.f32.xlu0 %v453
        %v506 = vpop.xlane.xlu0 %505
        %507 = vadd.xlane.f32.xlu0 %v454
        %v508 = vpop.xlane.xlu0 %507
        %509 = vadd.xlane.f32.xlu0 %v455
        %v510 = vpop.xlane.xlu0 %509
        %511 = vadd.xlane.f32.xlu0 %v456
        %v512 = vpop.xlane.xlu0 %511
        %513 = vadd.xlane.f32.xlu0 %v457
        %v514 = vpop.xlane.xlu0 %513
        %515 = vadd.xlane.f32.xlu0 %v458
        %v516 = vpop.xlane.xlu0 %515
        %517 = vadd.xlane.f32.xlu0 %v459
        %v518 = vpop.xlane.xlu0 %517
        %519 = vadd.xlane.f32.xlu0 %v460
        %v520 = vpop.xlane.xlu0 %519
        %521 = vadd.xlane.f32.xlu0 %v461
        %v522 = vpop.xlane.xlu0 %521
        %523 = vadd.xlane.f32.xlu0 %v462
        %v524 = vpop.xlane.xlu0 %523
        %525 = vadd.xlane.f32.xlu0 %v463
        %v526 = vpop.xlane.xlu0 %525
        %527 = vadd.xlane.f32.xlu0 %v464
        %v528 = vpop.xlane.xlu0 %527
        %v529 = vadd.f32 %v466, %v468
        %v530 = vadd.f32 %v529, %v470
        %v531 = vadd.f32 %v530, %v472
        %v532 = vadd.f32 %v531, %v474
        %v533 = vadd.f32 %v532, %v476
        %v534 = vadd.f32 %v533, %v478
        %v535 = vadd.f32 %v534, %v480
        %v536 = vadd.f32 %v482, %v484
        %v537 = vadd.f32 %v536, %v486
        %v538 = vadd.f32 %v537, %v488
        %v539 = vadd.f32 %v538, %v490
        %v540 = vadd.f32 %v539, %v492
        %v541 = vadd.f32 %v540, %v494
        %v542 = vadd.f32 %v541, %v496
        %v543 = vadd.f32 %v498, %v500
        %v544 = vadd.f32 %v543, %v502
        %v545 = vadd.f32 %v544, %v504
        %v546 = vadd.f32 %v545, %v506
        %v547 = vadd.f32 %v546, %v508
        %v548 = vadd.f32 %v547, %v510
        %v549 = vadd.f32 %v548, %v512
        %v550 = vadd.f32 %v514, %v516
        %v551 = vadd.f32 %v550, %v518
        %v552 = vadd.f32 %v551, %v520
        %v553 = vadd.f32 %v552, %v522
        %v554 = vadd.f32 %v553, %v524
        %v555 = vadd.f32 %v554, %v526
        %v556 = vadd.f32 %v555, %v528
        %v557 = vmul.f32 %v535, 0.0009775171
        %v558 = vmul.f32 %v542, 0.0009775171
        %v559 = vmul.f32 %v549, 0.0009775171
        %v560 = vmul.f32 %v556, 0.0009775171
        %v561 = vadd.f32 %v557, 1e-05
        %v562 = vadd.f32 %v558, 1e-05
        %v563 = vadd.f32 %v559, 1e-05
        %v564 = vadd.f32 %v560, 1e-05
        %v565 = vrsqrt.pop %v561
        %v566 = vmul.f32 %v561, %v565
        %vm567 = vcmp.eq.f32.partialorder %v561, inf
        %v568 = vsel %vm567, %v561, %v566
        %vm569 = vcmp.eq.f32.partialorder %v561, 0.0
        %v570 = vand.u32 %v561, 2147483648
        %v571 = vsel %vm569, %v570, %v568
        %v572 = vrsqrt.pop %v562
        %v573 = vmul.f32 %v562, %v572
        %vm574 = vcmp.eq.f32.partialorder %v562, inf
        %v575 = vsel %vm574, %v562, %v573
        %vm576 = vcmp.eq.f32.partialorder %v562, 0.0
        %v577 = vand.u32 %v562, 2147483648
        %v578 = vsel %vm576, %v577, %v575
        %v579 = vrsqrt.pop %v563
        %v580 = vmul.f32 %v563, %v579
        %vm581 = vcmp.eq.f32.partialorder %v563, inf
        %v582 = vsel %vm581, %v563, %v580
        %vm583 = vcmp.eq.f32.partialorder %v563, 0.0
        %v584 = vand.u32 %v563, 2147483648
        %v585 = vsel %vm583, %v584, %v582
        %v586 = vrsqrt.pop %v564
        %v587 = vmul.f32 %v564, %v586
        %vm588 = vcmp.eq.f32.partialorder %v564, inf
        %v589 = vsel %vm588, %v564, %v587
        %vm590 = vcmp.eq.f32.partialorder %v564, 0.0
        %v591 = vand.u32 %v564, 2147483648
        %v592 = vsel %vm590, %v591, %v589
        %v593 = vrsqrt.pop %v561
        %v594 = vrsqrt.pop %v562
        %v595 = vrsqrt.pop %v563
        %v596 = vrsqrt.pop %v564
        %v597 = vld [vmem:[%s1] sm:$0xff]
        %v598 = vld [vmem:[%s2] sm:$0xff]
        %v599 = vmul.f32 %v597, %v593
        %v600 = vmul.f32 %v597, %v594
        %v601 = vmul.f32 %v597, %v595
        %v602 = vmul.f32 %v597, %v596
        %v603 = vmul.f32 %v397, %v599
        %v604 = vmul.f32 %v398, %v600
        %v605 = vmul.f32 %v399, %v601
        %v606 = vmul.f32 %v400, %v602
        %v607 = vsub.f32 %v598, %v603
        %v608 = vsub.f32 %v598, %v604
        %v609 = vsub.f32 %v598, %v605
        %v610 = vsub.f32 %v598, %v606
        %612 = vset.pattern.permute.xlu0 0
        %613 = vperm.xlu0 %612, %v599
        %v614 = vpop.permute.xlu0 %613
        %617 = vset.pattern.permute.xlu0 0
        %618 = vperm.xlu0 %617, %v600
        %v619 = vpop.permute.xlu0 %618
        %622 = vset.pattern.permute.xlu0 0
        %623 = vperm.xlu0 %622, %v601
        %v624 = vpop.permute.xlu0 %623
        %627 = vset.pattern.permute.xlu0 0
        %628 = vperm.xlu0 %627, %v602
        %v629 = vpop.permute.xlu0 %628
        %v631 = vmul.f32 %v273, %v614
        %v632 = vmul.f32 %v274, %v614
        %v633 = vmul.f32 %v275, %v614
        %v634 = vmul.f32 %v276, %v614
        %v635 = vmul.f32 %v277, %v614
        %v636 = vmul.f32 %v278, %v614
        %v637 = vmul.f32 %v279, %v614
        %v638 = vmul.f32 %v280, %v614
        %v639 = vmul.f32 %v281, %v619
        %v640 = vmul.f32 %v282, %v619
        %v641 = vmul.f32 %v283, %v619
        %v642 = vmul.f32 %v284, %v619
        %v643 = vmul.f32 %v285, %v619
        %v644 = vmul.f32 %v286, %v619
        %v645 = vmul.f32 %v287, %v619
        %v646 = vmul.f32 %v288, %v619
        %v647 = vmul.f32 %v289, %v624
        %v648 = vmul.f32 %v290, %v624
        %v649 = vmul.f32 %v291, %v624
        %v650 = vmul.f32 %v292, %v624
        %v651 = vmul.f32 %v293, %v624
        %v652 = vmul.f32 %v294, %v624
        %v653 = vmul.f32 %v295, %v624
        %v654 = vmul.f32 %v296, %v624
        %v655 = vmul.f32 %v297, %v629
        %v656 = vmul.f32 %v298, %v629
        %v657 = vmul.f32 %v299, %v629
        %v658 = vmul.f32 %v300, %v629
        %v659 = vmul.f32 %v301, %v629
        %v660 = vmul.f32 %v302, %v629
        %v661 = vmul.f32 %v303, %v629
        %v662 = vmul.f32 %v304, %v629
        %664 = vset.pattern.permute.xlu0 0
        %665 = vperm.xlu0 %664, %v607
        %v666 = vpop.permute.xlu0 %665
        %669 = vset.pattern.permute.xlu0 0
        %670 = vperm.xlu0 %669, %v608
        %v671 = vpop.permute.xlu0 %670
        %674 = vset.pattern.permute.xlu0 0
        %675 = vperm.xlu0 %674, %v609
        %v676 = vpop.permute.xlu0 %675
        %679 = vset.pattern.permute.xlu0 0
        %680 = vperm.xlu0 %679, %v610
        %v681 = vpop.permute.xlu0 %680
        %v683 = vadd.f32 %v631, %v666
        %v684 = vadd.f32 %v632, %v666
        %v685 = vadd.f32 %v633, %v666
        %v686 = vadd.f32 %v634, %v666
        %v687 = vadd.f32 %v635, %v666
        %v688 = vadd.f32 %v636, %v666
        %v689 = vadd.f32 %v637, %v666
        %v690 = vadd.f32 %v638, %v666
        %v691 = vadd.f32 %v639, %v671
        %v692 = vadd.f32 %v640, %v671
        %v693 = vadd.f32 %v641, %v671
        %v694 = vadd.f32 %v642, %v671
        %v695 = vadd.f32 %v643, %v671
        %v696 = vadd.f32 %v644, %v671
        %v697 = vadd.f32 %v645, %v671
        %v698 = vadd.f32 %v646, %v671
        %v699 = vadd.f32 %v647, %v676
        %v700 = vadd.f32 %v648, %v676
        %v701 = vadd.f32 %v649, %v676
        %v702 = vadd.f32 %v650, %v676
        %v703 = vadd.f32 %v651, %v676
        %v704 = vadd.f32 %v652, %v676
        %v705 = vadd.f32 %v653, %v676
        %v706 = vadd.f32 %v654, %v676
        %v707 = vadd.f32 %v655, %v681
        %v708 = vadd.f32 %v656, %v681
        %v709 = vadd.f32 %v657, %v681
        %v710 = vadd.f32 %v658, %v681
        %v711 = vadd.f32 %v659, %v681
        %v712 = vadd.f32 %v660, %v681
        %v713 = vadd.f32 %v661, %v681
        %v714 = vadd.f32 %v662, %v681
        %715 = vst [vmem:[%s244] sm:$0xff] %v683
        %716 = vst [vmem:[%s244 + $0x8] sm:$0xff] %v684
        %717 = vst [vmem:[%s244 + $0x10] sm:$0xff] %v685
        %718 = vst [vmem:[%s244 + $0x18] sm:$0xff] %v686
        %719 = vst [vmem:[%s244 + $0x20] sm:$0xff] %v687
        %720 = vst [vmem:[%s244 + $0x28] sm:$0xff] %v688
        %721 = vst [vmem:[%s244 + $0x30] sm:$0xff] %v689
        %722 = vst [vmem:[%s244 + $0x38] sm:$0xff] %v690
        %723 = vst [vmem:[%s244 + $0x40] sm:$0xff] %v691
        %724 = vst [vmem:[%s244 + $0x48] sm:$0xff] %v692
        %725 = vst [vmem:[%s244 + $0x50] sm:$0xff] %v693
        %726 = vst [vmem:[%s244 + $0x58] sm:$0xff] %v694
        %727 = vst [vmem:[%s244 + $0x60] sm:$0xff] %v695
        %728 = vst [vmem:[%s244 + $0x68] sm:$0xff] %v696
        %729 = vst [vmem:[%s244 + $0x70] sm:$0xff] %v697
        %730 = vst [vmem:[%s244 + $0x78] sm:$0xff] %v698
        %731 = vst [vmem:[%s244 + $0x80] sm:$0xff] %v699
        %732 = vst [vmem:[%s244 + $0x88] sm:$0xff] %v700
        %733 = vst [vmem:[%s244 + $0x90] sm:$0xff] %v701
        %734 = vst [vmem:[%s244 + $0x98] sm:$0xff] %v702
        %735 = vst [vmem:[%s244 + $0xa0] sm:$0xff] %v703
        %736 = vst [vmem:[%s244 + $0xa8] sm:$0xff] %v704
        %737 = vst [vmem:[%s244 + $0xb0] sm:$0xff] %v705
        %738 = vst [vmem:[%s244 + $0xb8] sm:$0xff] %v706
        %739 = vst [vmem:[%s244 + $0xc0] sm:$0xff] %v707
        %740 = vst [vmem:[%s244 + $0xc8] sm:$0xff] %v708
        %741 = vst [vmem:[%s244 + $0xd0] sm:$0xff] %v709
        %742 = vst [vmem:[%s244 + $0xd8] sm:$0xff] %v710
        %743 = vst [vmem:[%s244 + $0xe0] sm:$0xff] %v711
        %744 = vst [vmem:[%s244 + $0xe8] sm:$0xff] %v712
        %745 = vst [vmem:[%s244 + $0xf0] sm:$0xff] %v713
        %746 = vst [vmem:[%s244 + $0xf8] sm:$0xff] %v714
        %vm747 = vcmask 7168
        %748 = vst.msk [vmem:[%s265] sm:$0xff] %vm747, %v397
        %749 = vst.msk [vmem:[%s265 + $0x8] sm:$0xff] %vm747, %v398
        %750 = vst.msk [vmem:[%s265 + $0x10] sm:$0xff] %vm747, %v399
        %751 = vst.msk [vmem:[%s265 + $0x18] sm:$0xff] %vm747, %v400
        %752 = vst.msk [vmem:[%s271] sm:$0xff] %vm747, %v571
        %753 = vst.msk [vmem:[%s271 + $0x8] sm:$0xff] %vm747, %v578
        %754 = vst.msk [vmem:[%s271 + $0x10] sm:$0xff] %vm747, %v585
        %755 = vst.msk [vmem:[%s271 + $0x18] sm:$0xff] %vm747, %v592
        %s756 = sand.u32 %s99, 1
        %s757 = scalar_lea.sflag [#allocation4], %s756
        %s758 = sand.u32 %s99, 1
        %s759 = smul.addr %s758, 256
        %s760 = scalar_lea.vmem [#allocation5], %s759
        %s761 = smul.u32 4, %s23
        %p762 = scmp.lt.s32.totalorder %s761, 7
        %s763 = scalar_select %p762, %s761, 7
        %s764 = smul.addr %s763, 8
        %s765 = scalar_lea.vmem %s4, %s764
        %s766 = smul.u32 4, %s23
        %p767 = scmp.lt.s32.totalorder %s766, 7
        %s768 = scalar_select %p767, %s766, 7
        %s769 = smul.addr %s768, 8
        %s770 = scalar_lea.vmem %s5, %s769
        // Predicated region
        $region37: #{ghost_batch_norm_forward.1} parent=31 // pred_check
          %p771 = pneg %p109
        $region38: #{ghost_batch_norm_forward.1} parent=31 // pred_check_branch
          %773 = sbr.rel (%p771) target = $region40
        $region39: #{ghost_batch_norm_forward.1} parent=31 // pred_region
          %s774 = smul.u32 4, %s23
          %s776 = ssub.s32 4096, 4096
          %777 = vsyncadd %s757, %s776
          %s778 = smul.addr %s774, 8
          %s779 = smul.addr %s778, 128
          %s780 = scalar_lea.hbm %s3, %s779
          %s781 = sshll.u32 %s760, 4
          %s782 = int_to_ptr.vmem [resolvable:$true] %s781
          %787 = dma.vmem_to_hbm [thread:$0]  %s782, 4096, %s780, %s757, 128, 128, 8
        $region40: #{ghost_batch_norm_forward.1} parent=31 // pred_fallthru
          _
        // Predicated region
        $region41: #{ghost_batch_norm_forward.1} parent=31 // pred_check
          %p788 = pneg %p135
        $region42: #{ghost_batch_norm_forward.1} parent=31 // pred_check_branch
          %790 = sbr.rel (%p788) target = $region44
        $region43: #{ghost_batch_norm_forward.1} parent=31 // pred_region
          %s791 = smul.u32 4, %s23
        $region44: #{ghost_batch_norm_forward.1} parent=31 // pred_fallthru
          _
        // Predicated region
        $region45: #{ghost_batch_norm_forward.1} parent=31 // pred_check
          %p792 = pneg %p161
        $region46: #{ghost_batch_norm_forward.1} parent=31 // pred_check_branch
          %794 = sbr.rel (%p792) target = $region48
        $region47: #{ghost_batch_norm_forward.1} parent=31 // pred_region
          %s795 = smul.u32 4, %s23
        $region48: #{ghost_batch_norm_forward.1} parent=31 // pred_fallthru
          _
      $region32: #{ghost_batch_norm_forward.1} parent=5 // pred_fallthru
        _
      %p796 = scmp.le.s32.totalorder 2, %s18
      // Predicated region
      $region49: #{ghost_batch_norm_forward.1} parent=5 // pred_check
        %p797 = pneg %p796
      $region50: #{ghost_batch_norm_forward.1} parent=5 // pred_check_branch
        %799 = sbr.rel (%p797) target = $region52
      $region51: #{ghost_batch_norm_forward.1} parent=5 // pred_region
        %s800 = ssub.s32 %s18, 2
        // Predicated region
        $region53: #{ghost_batch_norm_forward.1} parent=51 // pred_check
          %p801 = pneg %p115
        $region54: #{ghost_batch_norm_forward.1} parent=51 // pred_check_branch
          %803 = sbr.rel (%p801) target = $region56
        $region55: #{ghost_batch_norm_forward.1} parent=51 // pred_region
          %s804 = sand.u32 %s100, 1
          %s805 = scalar_lea.sflag [#allocation4], %s804
          %s806 = sand.u32 %s100, 1
          %s807 = smul.addr %s806, 256
          %s808 = scalar_lea.vmem [#allocation5], %s807
          %809 = dma.done %s805, 4096
        $region56: #{ghost_batch_norm_forward.1} parent=51 // pred_fallthru
          _
        // Predicated region
        $region57: #{ghost_batch_norm_forward.1} parent=51 // pred_check
          %p810 = pneg %p141
        $region58: #{ghost_batch_norm_forward.1} parent=51 // pred_check_branch
          %812 = sbr.rel (%p810) target = $region60
        $region59: #{ghost_batch_norm_forward.1} parent=51 // pred_region
          %s813 = smul.u32 4, %s24
          %p814 = scmp.lt.s32.totalorder %s813, 7
          %s815 = scalar_select %p814, %s813, 7
          %s816 = smul.addr %s815, 8
          %s817 = scalar_lea.vmem %s4, %s816
        $region60: #{ghost_batch_norm_forward.1} parent=51 // pred_fallthru
          _
        // Predicated region
        $region61: #{ghost_batch_norm_forward.1} parent=51 // pred_check
          %p818 = pneg %p167
        $region62: #{ghost_batch_norm_forward.1} parent=51 // pred_check_branch
          %820 = sbr.rel (%p818) target = $region64
        $region63: #{ghost_batch_norm_forward.1} parent=51 // pred_region
          %s821 = smul.u32 4, %s24
          %p822 = scmp.lt.s32.totalorder %s821, 7
          %s823 = scalar_select %p822, %s821, 7
          %s824 = smul.addr %s823, 8
          %s825 = scalar_lea.vmem %s5, %s824
        $region64: #{ghost_batch_norm_forward.1} parent=51 // pred_fallthru
          _
      $region52: #{ghost_batch_norm_forward.1} parent=5 // pred_fallthru
        _
    $region6: #{ghost_batch_norm_forward.1} parent=1 // loop_footer
      %s22 = sadd.s32 1, %s18
    $region7: #{ghost_batch_norm_forward.1} parent=1 // loop_footer_branch
      %17 = sbr.rel target = $region3
    $region8: #{ghost_batch_norm_forward.1} parent=1 // loop_exit
      _
    %826 = vsyncpa [#allocation3], 1
    %s827 = scalar_lea.sflag [#allocation3], 1
    %828 = vsyncpa %s827, 1
    %829 = vsyncpa [#allocation4], 1
    %s830 = scalar_lea.sflag [#allocation4], 1
    %831 = vsyncpa %s830, 1

</llo_original>
